<compile_context>
chip_gen: v6e
topology: v6e:2x2x1
jax: 0.10.0
libtpu: 0.0.40
codegen_flags: <defaults>
</compile_context>

<pallas_src>
import functools
import math

import jax
import jax.numpy as jnp
from jax.experimental import pallas as pl
from jax.experimental.pallas import tpu as pltpu


def _round_up(x, m):
    return (x + m - 1) // m * m


# ---------------------------------------------------------------------------
# In-kernel exact GELU (erf via A&S 7.1.26 polynomial; matches nn.GELU() ~1e-7)
# ---------------------------------------------------------------------------

def _erf(x):
    a1, a2, a3, a4, a5 = (0.254829592, -0.284496736, 1.421413741,
                          -1.453152027, 1.061405429)
    p = 0.3275911
    ax = jnp.abs(x)
    t = 1.0 / (1.0 + p * ax)
    poly = t * (a1 + t * (a2 + t * (a3 + t * (a4 + t * a5))))
    y = 1.0 - poly * jnp.exp(-ax * ax)
    return jnp.where(x >= 0.0, y, -y)


def _gelu_exact(x):
    return 0.5 * x * (1.0 + _erf(x * (1.0 / math.sqrt(2.0))))


# ---------------------------------------------------------------------------
# Fused MLP kernel: one row-tile of x per grid step, weights resident in VMEM.
# ---------------------------------------------------------------------------

def _mlp_kernel(x_ref, w1_ref, b1_ref, w2_ref, b2_ref, o_ref):
    h = jnp.dot(x_ref[...], w1_ref[...],
                preferred_element_type=jnp.float32) + b1_ref[...]
    a = _gelu_exact(h)                                   # exact-erf GELU
    o = jnp.dot(a, w2_ref[...],
                preferred_element_type=jnp.float32) + b2_ref[...]
    o_ref[...] = o.astype(o_ref.dtype)


# ---------------------------------------------------------------------------
# One-time parameter packing (PyTorch Linear layout in, kernel layout out)
# ---------------------------------------------------------------------------

def prepare_mlp_params(w1, b1, w2, b2, lane=128):
    """w1:(Hm,C) b1:(Hm,) w2:(C,Hm) b2:(C,)  ->  transposed, zero-padded operands."""
    Hm, C = w1.shape
    C_pad = _round_up(C, lane)
    H_pad = _round_up(Hm, lane)
    w1t = jnp.zeros((C_pad, H_pad), jnp.float32).at[:C, :Hm].set(w1.T)
    w2t = jnp.zeros((H_pad, C_pad), jnp.float32).at[:Hm, :C].set(w2.T)
    b1p = jnp.zeros((1, H_pad), jnp.float32).at[0, :Hm].set(b1)
    b2p = jnp.zeros((1, C_pad), jnp.float32).at[0, :C].set(b2)
    # Zero padding is exact: padded x-columns hit zero w1 rows, padded hidden
    # columns are gelu(0)*0-weight rows = 0, padded output columns stay 0.
    return dict(w1t=w1t, b1=b1p, w2t=w2t, b2=b2p,
                C=C, Hm=Hm, C_pad=C_pad, H_pad=H_pad)


# ---------------------------------------------------------------------------
# Forward wrapper: single fused pallas_call, row-tiled "parallel" grid.
# ---------------------------------------------------------------------------

def mlp_forward(params, x):
    C, C_pad, H_pad = params['C'], params['C_pad'], params['H_pad']
    lead = x.shape[:-1]
    M = math.prod(lead) if lead else 1
    x2 = x.reshape(M, x.shape[-1]).astype(jnp.float32)

    # Row tile: >=8 (sublane), <=256 (bounds VMEM working set on v7x), and
    # >=2 grid steps whenever possible so v7x can use both TensorCores.
    if M <= 8:
        row_tile = 8
    else:
        row_tile = min(256, _round_up((M + 1) // 2, 8))
    M_pad = _round_up(M, row_tile)

    # Fast path: skip the padding copy when x is already aligned.
    if M_pad == M and C_pad == C:
        x_pad = x2
    else:
        x_pad = jnp.zeros((M_pad, C_pad), jnp.float32).at[:M, :C].set(x2)

    grid = (M_pad // row_tile,)
    flops = 2 * M_pad * C_pad * H_pad * 2          # two matmuls
    bytes_accessed = 4 * (M_pad * C_pad * 2 + C_pad * H_pad * 2 + H_pad + C_pad)

    out = pl.pallas_call(
        _mlp_kernel,
        out_shape=jax.ShapeDtypeStruct((M_pad, C_pad), jnp.float32),
        grid_spec=pltpu.PrefetchScalarGridSpec(
            num_scalar_prefetch=0,
            grid=grid,
            in_specs=[
                pl.BlockSpec((row_tile, C_pad), lambda i: (i, 0)),   # x tile
                pl.BlockSpec((C_pad, H_pad), lambda i: (0, 0)),      # w1^T (resident)
                pl.BlockSpec((1, H_pad), lambda i: (0, 0)),          # b1
                pl.BlockSpec((H_pad, C_pad), lambda i: (0, 0)),      # w2^T (resident)
                pl.BlockSpec((1, C_pad), lambda i: (0, 0)),          # b2
            ],
            out_specs=pl.BlockSpec((row_tile, C_pad), lambda i: (i, 0)),
        ),
        compiler_params=pltpu.CompilerParams(
            dimension_semantics=("parallel",)),
        cost_estimate=pl.CostEstimate(
            flops=flops, transcendentals=M_pad * H_pad,
            bytes_accessed=bytes_accessed),
    )(x_pad, params['w1t'], params['b1'], params['w2t'], params['b2'])

    if M_pad == M and C_pad == C:
        return out.reshape(*lead, C)
    return out[:M, :C].reshape(*lead, C)


# ---------------------------------------------------------------------------
# Main
# ---------------------------------------------------------------------------

if __name__ == "__main__":
    B, N = 2, 8                     # batch, tokens
    in_channel, mlp_channel = 32, 128

    key = jax.random.PRNGKey(0)
    kx, k1, k2, k3, k4 = jax.random.split(key, 5)

    # PyTorch-style init: xavier_uniform_ weights, normal(std=1e-6) biases.
    bnd = math.sqrt(6.0 / (in_channel + mlp_channel))
    w1 = jax.random.uniform(k1, (mlp_channel, in_channel), jnp.float32, -bnd, bnd)
    b1 = 1e-6 * jax.random.normal(k2, (mlp_channel,), jnp.float32)
    w2 = jax.random.uniform(k3, (in_channel, mlp_channel), jnp.float32, -bnd, bnd)
    b2 = 1e-6 * jax.random.normal(k4, (in_channel,), jnp.float32)

    params = prepare_mlp_params(w1, b1, w2, b2)      # packed once, reused every call
    x = jax.random.normal(kx, (B, N, in_channel), jnp.float32)

    fwd = jax.jit(functools.partial(mlp_forward, params))
    y = fwd(x)
    jax.block_until_ready(y)

    # Pure-JAX reference (eval-mode dropout = identity).
    ref = jnp.dot(x, w1.T, precision=jax.lax.Precision.HIGHEST) + b1
    ref = jax.nn.gelu(ref, approximate=False)
    ref = jnp.dot(ref, w2.T, precision=jax.lax.Precision.HIGHEST) + b2

    assert y.shape == (B, N, in_channel)
    assert bool(jnp.all(jnp.isfinite(y)))
    err = float(jnp.max(jnp.abs(y - ref)))
    assert err < 5e-2, f"max abs err {err}"
    print("KERNEL_OK")
</pallas_src>

<mosaic_0001>
module attributes {stable_mosaic.version = 11 : i64} {
  func.func @_mlp_kernel(%arg0: i32, %arg1: memref<8x128xf32, #tpu.memory_space<vmem>>, %arg2: memref<128x128xf32, #tpu.memory_space<vmem>>, %arg3: memref<1x128xf32, #tpu.memory_space<vmem>>, %arg4: memref<128x128xf32, #tpu.memory_space<vmem>>, %arg5: memref<1x128xf32, #tpu.memory_space<vmem>>, %arg6: memref<8x128xf32, #tpu.memory_space<vmem>>) attributes {dimension_semantics = [#tpu.dimension_semantics<parallel>], iteration_bounds = array<i64: 2>, scalar_prefetch = 0 : i64, scratch_operands = 0 : i64, tpu.core_type = #tpu.core_type<tc>, window_params = [{transform_indices = @transform_0, window_bounds = array<i64: 8, 128>}, {pipeline_mode = #tpu.pipeline_mode<synchronous>, transform_indices = @transform_1, window_bounds = array<i64: 128, 128>}, {pipeline_mode = #tpu.pipeline_mode<synchronous>, transform_indices = @transform_2, window_bounds = array<i64: 1, 128>}, {pipeline_mode = #tpu.pipeline_mode<synchronous>, transform_indices = @transform_3, window_bounds = array<i64: 128, 128>}, {pipeline_mode = #tpu.pipeline_mode<synchronous>, transform_indices = @transform_4, window_bounds = array<i64: 1, 128>}, {transform_indices = @transform_5, window_bounds = array<i64: 8, 128>}]} {
    %c0 = arith.constant 0 : index
    %c0_0 = arith.constant 0 : index
    %0 = vector.load %arg1[%c0, %c0_0] : memref<8x128xf32, #tpu.memory_space<vmem>>, vector<8x128xf32>
    %c0_1 = arith.constant 0 : index
    %c0_2 = arith.constant 0 : index
    %1 = vector.load %arg2[%c0_1, %c0_2] : memref<128x128xf32, #tpu.memory_space<vmem>>, vector<128x128xf32>
    %cst = arith.constant dense<0.000000e+00> : vector<8x128xf32>
    %2 = tpu.matmul %0, %1, %cst {dimension_numbers = #tpu.dot_dimension_numbers<[1], [0], [0], [1], [0, 0, 1, 1], [], []>} : vector<8x128xf32>, vector<128x128xf32>, vector<8x128xf32> -> vector<8x128xf32>
    %c0_3 = arith.constant 0 : index
    %c0_4 = arith.constant 0 : index
    %3 = vector.load %arg3[%c0_3, %c0_4] : memref<1x128xf32, #tpu.memory_space<vmem>>, vector<1x128xf32>
    %4 = vector.broadcast %3 : vector<1x128xf32> to vector<8x128xf32>
    %5 = arith.addf %2, %4 : vector<8x128xf32>
    %cst_5 = arith.constant 5.000000e-01 : f32
    %6 = vector.broadcast %cst_5 : f32 to vector<8x128xf32>
    %7 = arith.mulf %6, %5 : vector<8x128xf32>
    %cst_6 = arith.constant 0.707106769 : f32
    %8 = vector.broadcast %cst_6 : f32 to vector<8x128xf32>
    %9 = arith.mulf %5, %8 : vector<8x128xf32>
    %10 = math.absf %9 : vector<8x128xf32>
    %cst_7 = arith.constant 0.327591091 : f32
    %11 = vector.broadcast %cst_7 : f32 to vector<8x128xf32>
    %12 = arith.mulf %11, %10 : vector<8x128xf32>
    %cst_8 = arith.constant 1.000000e+00 : f32
    %13 = vector.broadcast %cst_8 : f32 to vector<8x128xf32>
    %14 = arith.addf %13, %12 : vector<8x128xf32>
    %cst_9 = arith.constant 1.000000e+00 : f32
    %15 = vector.broadcast %cst_9 : f32 to vector<8x128xf32>
    %16 = arith.divf %15, %14 : vector<8x128xf32>
    %cst_10 = arith.constant 1.06140542 : f32
    %17 = vector.broadcast %cst_10 : f32 to vector<8x128xf32>
    %18 = arith.mulf %16, %17 : vector<8x128xf32>
    %cst_11 = arith.constant -1.45315206 : f32
    %19 = vector.broadcast %cst_11 : f32 to vector<8x128xf32>
    %20 = arith.addf %19, %18 : vector<8x128xf32>
    %21 = arith.mulf %16, %20 : vector<8x128xf32>
    %cst_12 = arith.constant 1.42141378 : f32
    %22 = vector.broadcast %cst_12 : f32 to vector<8x128xf32>
    %23 = arith.addf %22, %21 : vector<8x128xf32>
    %24 = arith.mulf %16, %23 : vector<8x128xf32>
    %cst_13 = arith.constant -0.284496725 : f32
    %25 = vector.broadcast %cst_13 : f32 to vector<8x128xf32>
    %26 = arith.addf %25, %24 : vector<8x128xf32>
    %27 = arith.mulf %16, %26 : vector<8x128xf32>
    %cst_14 = arith.constant 0.254829586 : f32
    %28 = vector.broadcast %cst_14 : f32 to vector<8x128xf32>
    %29 = arith.addf %28, %27 : vector<8x128xf32>
    %30 = arith.mulf %16, %29 : vector<8x128xf32>
    %cst_15 = arith.constant 0.000000e+00 : f32
    %31 = vector.broadcast %cst_15 : f32 to vector<8x128xf32>
    %32 = arith.subf %31, %10 : vector<8x128xf32>
    %33 = arith.mulf %32, %10 : vector<8x128xf32>
    %34 = math.exp %33 : vector<8x128xf32>
    %35 = arith.mulf %30, %34 : vector<8x128xf32>
    %cst_16 = arith.constant 1.000000e+00 : f32
    %36 = vector.broadcast %cst_16 : f32 to vector<8x128xf32>
    %37 = arith.subf %36, %35 : vector<8x128xf32>
    %cst_17 = arith.constant 0.000000e+00 : f32
    %38 = vector.broadcast %cst_17 : f32 to vector<8x128xf32>
    %39 = arith.cmpf oge, %9, %38 : vector<8x128xf32>
    %cst_18 = arith.constant 0.000000e+00 : f32
    %40 = vector.broadcast %cst_18 : f32 to vector<8x128xf32>
    %41 = arith.subf %40, %37 : vector<8x128xf32>
    %42 = arith.select %39, %37, %41 : vector<8x128xi1>, vector<8x128xf32>
    %cst_19 = arith.constant 1.000000e+00 : f32
    %43 = vector.broadcast %cst_19 : f32 to vector<8x128xf32>
    %44 = arith.addf %43, %42 : vector<8x128xf32>
    %45 = arith.mulf %7, %44 : vector<8x128xf32>
    %c0_20 = arith.constant 0 : index
    %c0_21 = arith.constant 0 : index
    %46 = vector.load %arg4[%c0_20, %c0_21] : memref<128x128xf32, #tpu.memory_space<vmem>>, vector<128x128xf32>
    %cst_22 = arith.constant dense<0.000000e+00> : vector<8x128xf32>
    %47 = tpu.matmul %45, %46, %cst_22 {dimension_numbers = #tpu.dot_dimension_numbers<[1], [0], [0], [1], [0, 0, 1, 1], [], []>} : vector<8x128xf32>, vector<128x128xf32>, vector<8x128xf32> -> vector<8x128xf32>
    %c0_23 = arith.constant 0 : index
    %c0_24 = arith.constant 0 : index
    %48 = vector.load %arg5[%c0_23, %c0_24] : memref<1x128xf32, #tpu.memory_space<vmem>>, vector<1x128xf32>
    %49 = vector.broadcast %48 : vector<1x128xf32> to vector<8x128xf32>
    %50 = arith.addf %47, %49 : vector<8x128xf32>
    %c0_25 = arith.constant 0 : index
    %c0_26 = arith.constant 0 : index
    %51 = vector.load %arg6[%c0_25, %c0_26] : memref<8x128xf32, #tpu.memory_space<vmem>>, vector<8x128xf32>
    tpu.vector_store %arg6[%c0_25, %c0_26], %50 {strides = array<i32>} : memref<8x128xf32, #tpu.memory_space<vmem>>, vector<8x128xf32>,
    return
  }
  func.func @transform_0(%arg0: i32) -> (i32, i32) {
    %c0_i32 = arith.constant 0 : i32
    %c0_i32_0 = arith.constant 0 : i32
    return %arg0, %c0_i32 : i32, i32
  }
  func.func @transform_1(%arg0: i32) -> (i32, i32) {
    %c0_i32 = arith.constant 0 : i32
    %c0_i32_0 = arith.constant 0 : i32
    %c0_i32_1 = arith.constant 0 : i32
    return %c0_i32, %c0_i32_0 : i32, i32
  }
  func.func @transform_2(%arg0: i32) -> (i32, i32) {
    %c0_i32 = arith.constant 0 : i32
    %c0_i32_0 = arith.constant 0 : i32
    %c0_i32_1 = arith.constant 0 : i32
    return %c0_i32, %c0_i32_0 : i32, i32
  }
  func.func @transform_3(%arg0: i32) -> (i32, i32) {
    %c0_i32 = arith.constant 0 : i32
    %c0_i32_0 = arith.constant 0 : i32
    %c0_i32_1 = arith.constant 0 : i32
    return %c0_i32, %c0_i32_0 : i32, i32
  }
  func.func @transform_4(%arg0: i32) -> (i32, i32) {
    %c0_i32 = arith.constant 0 : i32
    %c0_i32_0 = arith.constant 0 : i32
    %c0_i32_1 = arith.constant 0 : i32
    return %c0_i32, %c0_i32_0 : i32, i32
  }
  func.func @transform_5(%arg0: i32) -> (i32, i32) {
    %c0_i32 = arith.constant 0 : i32
    %c0_i32_0 = arith.constant 0 : i32
    return %arg0, %c0_i32 : i32, i32
  }
}

</mosaic_0001>

<llo_original>
// kernel: mlp_forward.1
$region0: #{mlp_forward.1}
  #allocation0 [shape = 'u32[]', space=smem, size = 0x4, offset = 0x4, fixed_abs, tag = 'smem constant byte address 0x4 - core index']
  #allocation1 [shape = 'u32[144,128]{1,0:T(1,128)}', space=vmem, size = 0x12000, scoped, tag = 'internal scratch']
  %s0 = inlined_call_operand.vmem [shape: f32[16,128], index: 0, kind: input, shape index: {}]
  %s1 = inlined_call_operand.hbm [shape: f32[128,128], index: 1, kind: input, shape index: {}]
  %s2 = inlined_call_operand.vmem [shape: f32[1,128], index: 2, kind: input, shape index: {}]
  %s3 = inlined_call_operand.hbm [shape: f32[128,128], index: 3, kind: input, shape index: {}]
  %s4 = inlined_call_operand.vmem [shape: f32[1,128], index: 4, kind: input, shape index: {}]
  %s5 = inlined_call_operand.vmem [shape: f32[16,128], index: 5, kind: output, shape index: {}]
  %s6 = sld [smem:[#allocation0]]
  $region61: #{mlp_forward.1} parent=0
    _
  %s8 = ssub.s32 1, %s6
  %s9 = scalar_select 0, %s8, %s6
  $region1: #{mlp_forward.1} parent=0
    #allocation2 [shape = 'u8[65536]{0}', space=vmem, size = 0x10000, scoped, tag = 'input window, operand 1, single buffered']
    #allocation3 [shape = 's32[2]{0}', space=sflag, size = 0x8, scoped, tag = 'scoped memory for mlp_forward.1']
    #allocation4 [shape = 'u8[65536]{0}', space=vmem, size = 0x10000, scoped, tag = 'input window, operand 3, single buffered']
    #allocation5 [shape = 's32[1]{0}', space=sflag, size = 0x4, scoped, tag = 'scoped memory for mlp_forward.1']
    %10 = vsyncpa [#allocation3], 0
    %11 = vsyncpa [#allocation5], 0
    loop: start=0, step=1, limit=4
    $region2: #{mlp_forward.1} parent=1 // loop_pre_header
      _
    $region3: #{mlp_forward.1} parent=1 // loop_header
      %s13 = sphi 0, %s17
      %p14 = scmp.ge.s32.totalorder %s13, 4
      %s23 = sphi 0, %s25
      %s26 = sphi 0, %s23
      %s27 = sphi 0, %s26
      %s43 = sphi 0, %s27
      %s47 = sphi 0, %s47
      %s49 = sphi 0, %s47
      %s50 = sphi 0, %s49
      %s64 = sphi 0, %s50
      %s68 = sphi 0, %s68
      %s70 = sphi 0, %s68
      %s71 = sphi 0, %s70
      %s85 = sphi 0, %s71
      %s89 = sphi 0, %s89
      %s91 = sphi 0, %s89
      %s92 = sphi 0, %s91
      %s106 = sphi 0, %s92
      %s110 = sphi 0, %s110
      %s112 = sphi 0, %s110
      %s113 = sphi 0, %s112
      %s127 = sphi 0, %s113
      %s133 = sphi 0, %s135
      %s136 = sphi 0, %s133
      %s137 = sphi 0, %s136
      %s153 = sphi 0, %s137
    $region4: #{mlp_forward.1} parent=1 // loop_header_branch
      %16 = sbr.rel (%p14) target = $region8
    $region5: #{mlp_forward.1} parent=1 // loop_body
      %s18 = ssub.s32 %s13, 1
      %s19 = ssub.s32 %s13, 2
      %s20 = sadd.s32 %s13, 1
      %s21 = ssub.s32 %s13, %s20
      %p22 = scmp.eq.s32.totalorder %s21, 0
      %s24 = sadd.s32 %s23, 1
      %s25 = scalar_select %p22, %s23, %s24
      %p28 = pneg %p22
      %p29 = scmp.eq.s32.totalorder %s13, 1
      %p30 = por %p28, %p29
      %p31 = scmp.ne.s32.totalorder %s23, %s26
      %p32 = scmp.eq.s32.totalorder %s13, 0
      %p33 = por %p31, %p32
      %p34 = scmp.ne.s32.totalorder %s23, %s26
      %p35 = scmp.eq.s32.totalorder %s18, 1
      %p36 = por %p34, %p35
      %p37 = scmp.ne.s32.totalorder %s26, %s27
      %p38 = scmp.eq.s32.totalorder %s18, 0
      %p39 = por %p37, %p38
      %p40 = scmp.ne.s32.totalorder %s26, %s27
      %p41 = scmp.eq.s32.totalorder %s19, 1
      %p42 = por %p40, %p41
      %p44 = scmp.ne.s32.totalorder %s27, %s43
      %p45 = scmp.eq.s32.totalorder %s19, 0
      %p46 = por %p44, %p45
      %s48 = sadd.s32 %s47, 1
      %p51 = scmp.eq.s32.totalorder %s13, 1
      %p52 = scmp.ne.s32.totalorder %s47, %s49
      %p53 = scmp.eq.s32.totalorder %s13, 0
      %p54 = por %p52, %p53
      %p55 = scmp.ne.s32.totalorder %s47, %s49
      %p56 = scmp.eq.s32.totalorder %s18, 1
      %p57 = por %p55, %p56
      %p58 = scmp.ne.s32.totalorder %s49, %s50
      %p59 = scmp.eq.s32.totalorder %s18, 0
      %p60 = por %p58, %p59
      %p61 = scmp.ne.s32.totalorder %s49, %s50
      %p62 = scmp.eq.s32.totalorder %s19, 1
      %p63 = por %p61, %p62
      %p65 = scmp.ne.s32.totalorder %s50, %s64
      %p66 = scmp.eq.s32.totalorder %s19, 0
      %p67 = por %p65, %p66
      %s69 = sadd.s32 %s68, 1
      %p72 = scmp.eq.s32.totalorder %s13, 1
      %p73 = scmp.ne.s32.totalorder %s68, %s70
      %p74 = scmp.eq.s32.totalorder %s13, 0
      %p75 = por %p73, %p74
      %p76 = scmp.ne.s32.totalorder %s68, %s70
      %p77 = scmp.eq.s32.totalorder %s18, 1
      %p78 = por %p76, %p77
      %p79 = scmp.ne.s32.totalorder %s70, %s71
      %p80 = scmp.eq.s32.totalorder %s18, 0
      %p81 = por %p79, %p80
      %p82 = scmp.ne.s32.totalorder %s70, %s71
      %p83 = scmp.eq.s32.totalorder %s19, 1
      %p84 = por %p82, %p83
      %p86 = scmp.ne.s32.totalorder %s71, %s85
      %p87 = scmp.eq.s32.totalorder %s19, 0
      %p88 = por %p86, %p87
      %s90 = sadd.s32 %s89, 1
      %p93 = scmp.eq.s32.totalorder %s13, 1
      %p94 = scmp.ne.s32.totalorder %s89, %s91
      %p95 = scmp.eq.s32.totalorder %s13, 0
      %p96 = por %p94, %p95
      %p97 = scmp.ne.s32.totalorder %s89, %s91
      %p98 = scmp.eq.s32.totalorder %s18, 1
      %p99 = por %p97, %p98
      %p100 = scmp.ne.s32.totalorder %s91, %s92
      %p101 = scmp.eq.s32.totalorder %s18, 0
      %p102 = por %p100, %p101
      %p103 = scmp.ne.s32.totalorder %s91, %s92
      %p104 = scmp.eq.s32.totalorder %s19, 1
      %p105 = por %p103, %p104
      %p107 = scmp.ne.s32.totalorder %s92, %s106
      %p108 = scmp.eq.s32.totalorder %s19, 0
      %p109 = por %p107, %p108
      %s111 = sadd.s32 %s110, 1
      %p114 = scmp.eq.s32.totalorder %s13, 1
      %p115 = scmp.ne.s32.totalorder %s110, %s112
      %p116 = scmp.eq.s32.totalorder %s13, 0
      %p117 = por %p115, %p116
      %p118 = scmp.ne.s32.totalorder %s110, %s112
      %p119 = scmp.eq.s32.totalorder %s18, 1
      %p120 = por %p118, %p119
      %p121 = scmp.ne.s32.totalorder %s112, %s113
      %p122 = scmp.eq.s32.totalorder %s18, 0
      %p123 = por %p121, %p122
      %p124 = scmp.ne.s32.totalorder %s112, %s113
      %p125 = scmp.eq.s32.totalorder %s19, 1
      %p126 = por %p124, %p125
      %p128 = scmp.ne.s32.totalorder %s113, %s127
      %p129 = scmp.eq.s32.totalorder %s19, 0
      %p130 = por %p128, %p129
      %s131 = ssub.s32 %s13, %s20
      %p132 = scmp.eq.s32.totalorder %s131, 0
      %s134 = sadd.s32 %s133, 1
      %s135 = scalar_select %p132, %s133, %s134
      %p138 = pneg %p132
      %p139 = scmp.eq.s32.totalorder %s13, 1
      %p140 = por %p138, %p139
      %p141 = scmp.ne.s32.totalorder %s133, %s136
      %p142 = scmp.eq.s32.totalorder %s13, 0
      %p143 = por %p141, %p142
      %p144 = scmp.ne.s32.totalorder %s133, %s136
      %p145 = scmp.eq.s32.totalorder %s18, 1
      %p146 = por %p144, %p145
      %p147 = scmp.ne.s32.totalorder %s136, %s137
      %p148 = scmp.eq.s32.totalorder %s18, 0
      %p149 = por %p147, %p148
      %p150 = scmp.ne.s32.totalorder %s136, %s137
      %p151 = scmp.eq.s32.totalorder %s19, 1
      %p152 = por %p150, %p151
      %p154 = scmp.ne.s32.totalorder %s137, %s153
      %p155 = scmp.eq.s32.totalorder %s19, 0
      %p156 = por %p154, %p155
      %p157 = scmp.le.s32.totalorder 1, %s13
      %p158 = scmp.lt.s32.totalorder %s13, 3
      %p159 = pnand %p157, %p158
      %p160 = pneg %p159
      // Predicated region
      $region9: #{mlp_forward.1} parent=5 // pred_check
        _
      $region10: #{mlp_forward.1} parent=5 // pred_check_branch
        %162 = sbr.rel (%p159) target = $region12
      $region11: #{mlp_forward.1} parent=5 // pred_region
        %s163 = ssub.s32 %s13, 1
        // Predicated region
        $region13: #{mlp_forward.1} parent=11 // pred_check
          %p164 = pneg %p60
        $region14: #{mlp_forward.1} parent=11 // pred_check_branch
          %166 = sbr.rel (%p164) target = $region16
        $region15: #{mlp_forward.1} parent=11 // pred_region
          %s168 = ssub.s32 2048, 2048
          %169 = vsyncadd [#allocation3], %s168
          %s170 = sshll.u32 [#allocation2], 4
          %s171 = int_to_ptr.vmem [resolvable:$true] %s170
          %176 = dma.hbm_to_vmem [thread:$0]  %s1, 2048, %s171, [#allocation3], 128, 128, 8
        $region16: #{mlp_forward.1} parent=11 // pred_fallthru
          _
        // Predicated region
        $region17: #{mlp_forward.1} parent=11 // pred_check
          %p177 = pneg %p81
        $region18: #{mlp_forward.1} parent=11 // pred_check_branch
          %179 = sbr.rel (%p177) target = $region20
        $region19: #{mlp_forward.1} parent=11 // pred_region
          _
        $region20: #{mlp_forward.1} parent=11 // pred_fallthru
          _
        // Predicated region
        $region21: #{mlp_forward.1} parent=11 // pred_check
          %p180 = pneg %p102
        $region22: #{mlp_forward.1} parent=11 // pred_check_branch
          %182 = sbr.rel (%p180) target = $region24
        $region23: #{mlp_forward.1} parent=11 // pred_region
          %s184 = ssub.s32 2048, 2048
          %185 = vsyncadd [#allocation5], %s184
          %s186 = sshll.u32 [#allocation4], 4
          %s187 = int_to_ptr.vmem [resolvable:$true] %s186
          %192 = dma.hbm_to_vmem [thread:$0]  %s3, 2048, %s187, [#allocation5], 128, 128, 8
        $region24: #{mlp_forward.1} parent=11 // pred_fallthru
          _
        // Predicated region
        $region25: #{mlp_forward.1} parent=11 // pred_check
          %p193 = pneg %p123
        $region26: #{mlp_forward.1} parent=11 // pred_check_branch
          %195 = sbr.rel (%p193) target = $region28
        $region27: #{mlp_forward.1} parent=11 // pred_region
          _
        $region28: #{mlp_forward.1} parent=11 // pred_fallthru
          _
      $region12: #{mlp_forward.1} parent=5 // pred_fallthru
        _
      %p196 = scmp.lt.s32.totalorder %s13, 2
      // Predicated region
      $region29: #{mlp_forward.1} parent=5 // pred_check
        %p197 = pneg %p196
      $region30: #{mlp_forward.1} parent=5 // pred_check_branch
        %199 = sbr.rel (%p197) target = $region32
      $region31: #{mlp_forward.1} parent=5 // pred_region
        // Predicated region
        $region33: #{mlp_forward.1} parent=31 // pred_check
          %p200 = pneg %p33
        $region34: #{mlp_forward.1} parent=31 // pred_check_branch
          %202 = sbr.rel (%p200) target = $region36
        $region35: #{mlp_forward.1} parent=31 // pred_region
          %p203 = scmp.lt.s32.totalorder %s13, 1
          %s204 = scalar_select %p203, %s13, 1
          %s205 = smul.addr %s204, 8
          %s206 = scalar_lea.vmem %s0, %s205
        $region36: #{mlp_forward.1} parent=31 // pred_fallthru
          _
      $region32: #{mlp_forward.1} parent=5 // pred_fallthru
        _
      %p207 = scmp.le.s32.totalorder 1, %s13
      %p208 = scmp.lt.s32.totalorder %s13, 3
      %p209 = pnand %p207, %p208
      %p210 = pneg %p209
      // Predicated region
      $region37: #{mlp_forward.1} parent=5 // pred_check
        _
      $region38: #{mlp_forward.1} parent=5 // pred_check_branch
        %212 = sbr.rel (%p209) target = $region40
      $region39: #{mlp_forward.1} parent=5 // pred_region
        %s213 = ssub.s32 %s13, 1
        // Predicated region
        $region41: #{mlp_forward.1} parent=39 // pred_check
          %p214 = pneg %p60
        $region42: #{mlp_forward.1} parent=39 // pred_check_branch
          %216 = sbr.rel (%p214) target = $region44
        $region43: #{mlp_forward.1} parent=39 // pred_region
          %217 = dma.done [#allocation3], 2048
        $region44: #{mlp_forward.1} parent=39 // pred_fallthru
          _
        // Predicated region
        $region45: #{mlp_forward.1} parent=39 // pred_check
          %p218 = pneg %p102
        $region46: #{mlp_forward.1} parent=39 // pred_check_branch
          %220 = sbr.rel (%p218) target = $region48
        $region47: #{mlp_forward.1} parent=39 // pred_region
          %221 = dma.done [#allocation5], 2048
        $region48: #{mlp_forward.1} parent=39 // pred_fallthru
          _
        %p222 = scmp.lt.s32.totalorder %s18, 1
        %s223 = scalar_select %p222, %s18, 1
        %s224 = smul.addr %s223, 8
        %s225 = scalar_lea.vmem %s0, %s224
        %p226 = pneg %p39
        %p227 = pneg %p36
        %p228 = pneg %p60
        %p229 = pneg %p57
        %p230 = pneg %p81
        %p231 = pneg %p78
        %p232 = pneg %p102
        %p233 = pneg %p99
        %p234 = pneg %p123
        %p235 = pneg %p120
        %p236 = pneg %p149
        %p237 = pneg %p146
        %p238 = scmp.lt.s32.totalorder %s18, 1
        %s239 = scalar_select %p238, %s18, 1
        %s240 = smul.addr %s239, 8
        %s241 = scalar_lea.vmem %s5, %s240
        %p242 = scmp.lt.s32.totalorder %s18, 1
        %s243 = scalar_select %p242, %s18, 1
        %s244 = smul.addr %s243, 8
        %s245 = scalar_lea.vmem %s0, %s244
        %p246 = scmp.lt.s32.totalorder %s18, 1
        %s247 = scalar_select %p246, %s18, 1
        %s248 = smul.addr %s247, 8
        %s249 = scalar_lea.vmem %s5, %s248
        %v250 = vld [vmem:[%s245] sm:$0xff]
        %v251 = vld [vmem:[#allocation2] sm:$0xff]
        %v252 = vld [vmem:[#allocation2 + $0x8] sm:$0xff]
        %v253 = vld [vmem:[#allocation2 + $0x10] sm:$0xff]
        %v254 = vld [vmem:[#allocation2 + $0x18] sm:$0xff]
        %v255 = vld [vmem:[#allocation2 + $0x20] sm:$0xff]
        %v256 = vld [vmem:[#allocation2 + $0x28] sm:$0xff]
        %v257 = vld [vmem:[#allocation2 + $0x30] sm:$0xff]
        %v258 = vld [vmem:[#allocation2 + $0x38] sm:$0xff]
        %v259 = vld [vmem:[#allocation2 + $0x40] sm:$0xff]
        %v260 = vld [vmem:[#allocation2 + $0x48] sm:$0xff]
        %v261 = vld [vmem:[#allocation2 + $0x50] sm:$0xff]
        %v262 = vld [vmem:[#allocation2 + $0x58] sm:$0xff]
        %v263 = vld [vmem:[#allocation2 + $0x60] sm:$0xff]
        %v264 = vld [vmem:[#allocation2 + $0x68] sm:$0xff]
        %v265 = vld [vmem:[#allocation2 + $0x70] sm:$0xff]
        %v266 = vld [vmem:[#allocation2 + $0x78] sm:$0xff]
        %v267 = vld [vmem:[%s2] sm:$0x1]
        %v269 = vlaneseq
        %v270 = vshrl.u32 %v269, 7
        %v271 = vsub.s32 0, %v270
        %v272 = vrot.slane %v267, %v271
        %274 = vmatprep.subr.mxu0 0.0
        %275 = vmatpush1.msra.mxu0 %v266
        %276 = vmatprep.subr.mxu0 0.0
        %277 = vmatpush1.msra.mxu0 %v265
        %278 = vmatprep.subr.mxu0 0.0
        %279 = vmatpush1.msra.mxu0 %v264
        %280 = vmatprep.subr.mxu0 0.0
        %281 = vmatpush1.msra.mxu0 %v263
        %282 = vmatprep.subr.mxu0 0.0
        %283 = vmatpush1.msra.mxu0 %v262
        %284 = vmatprep.subr.mxu0 0.0
        %285 = vmatpush1.msra.mxu0 %v261
        %286 = vmatprep.subr.mxu0 0.0
        %287 = vmatpush1.msra.mxu0 %v260
        %288 = vmatprep.subr.mxu0 0.0
        %289 = vmatpush1.msra.mxu0 %v259
        %290 = vmatprep.subr.mxu0 0.0
        %291 = vmatpush1.msra.mxu0 %v258
        %292 = vmatprep.subr.mxu0 0.0
        %293 = vmatpush1.msra.mxu0 %v257
        %294 = vmatprep.subr.mxu0 0.0
        %295 = vmatpush1.msra.mxu0 %v256
        %296 = vmatprep.subr.mxu0 0.0
        %297 = vmatpush1.msra.mxu0 %v255
        %298 = vmatprep.subr.mxu0 0.0
        %299 = vmatpush1.msra.mxu0 %v254
        %300 = vmatprep.subr.mxu0 0.0
        %301 = vmatpush1.msra.mxu0 %v253
        %302 = vmatprep.subr.mxu0 0.0
        %303 = vmatpush1.msra.mxu0 %v252
        %304 = vmatprep.subr.mxu0 0.0
        %305 = vmatpush1.msra.mxu0 %v251
        %306 = vmatprep.subr.mxu0 0.0
        %307 = vmatpush2.msra.mxu0 0.0
        %308 = vmatprep.subr.mxu0 0.0
        %309 = vmatpush2.msra.mxu0 0.0
        %310 = vmatprep.subr.mxu0 0.0
        %311 = vmatpush2.msra.mxu0 0.0
        %312 = vmatprep.subr.mxu0 0.0
        %313 = vmatpush2.msra.mxu0 0.0
        %314 = vmatprep.subr.mxu0 0.0
        %315 = vmatpush2.msra.mxu0 0.0
        %316 = vmatprep.subr.mxu0 0.0
        %317 = vmatpush2.msra.mxu0 0.0
        %318 = vmatprep.subr.mxu0 0.0
        %319 = vmatpush2.msra.mxu0 0.0
        %320 = vmatprep.subr.mxu0 0.0
        %321 = vmatpush2.msra.mxu0 0.0
        %322 = vmatprep.subr.mxu0 0.0
        %323 = vmatpush2.msra.mxu0 0.0
        %324 = vmatprep.subr.mxu0 0.0
        %325 = vmatpush2.msra.mxu0 0.0
        %326 = vmatprep.subr.mxu0 0.0
        %327 = vmatpush2.msra.mxu0 0.0
        %328 = vmatprep.subr.mxu0 0.0
        %329 = vmatpush2.msra.mxu0 0.0
        %330 = vmatprep.subr.mxu0 0.0
        %331 = vmatpush2.msra.mxu0 0.0
        %332 = vmatprep.subr.mxu0 0.0
        %333 = vmatpush2.msra.mxu0 0.0
        %334 = vmatprep.subr.mxu0 0.0
        %335 = vmatpush2.msra.mxu0 0.0
        %336 = vmatprep.subr.mxu0 0.0
        %337 = vmatpush2.msra.mxu0 0.0
        %338 = vmatprep.mubr.f32.mxu0 0.0
        %339 = vmatmul.mubr.f32.gmra.mxu0 %v250
        %v340 = vpop.f32.mrf.mxu0
        %v341 = vadd.f32 %v272, %v340
        %v342 = vpop.f32.mrf.mxu0
        %343 = vdwg.mxu0
        %v344 = vmul.f32 %v341, 0.5
        %v345 = vmul.f32 %v341, 0.70710677
        %v346 = vand.u32 2147483647, %v345
        %v347 = vmul.f32 %v346, 0.3275911
        %v348 = vadd.f32 %v347, 1.0
        %v349 = vrcp.pop %v348
        %v350 = vmul.f32 1.0, %v349
        %v351 = vmul.f32 %v350, 1.0614054
        %v352 = vadd.f32 %v351, -1.4531521
        %v353 = vmul.f32 %v350, %v352
        %v354 = vadd.f32 %v353, 1.4214138
        %v355 = vmul.f32 %v350, %v354
        %v356 = vadd.f32 %v355, -0.28449672
        %v357 = vmul.f32 %v350, %v356
        %v358 = vadd.f32 %v357, 0.2548296
        %v359 = vmul.f32 %v350, %v358
        %v360 = vsub.f32 0.0, %v346
        %v361 = vmul.f32 %v360, %v346
        %v362 = vmul.f32 %v361, 1.442695
        %v363 = vpow.pop %v362
        %v364 = vmul.f32 %v359, %v363
        %v365 = vsub.f32 1.0, %v364
        %vm366 = vcmp.ge.f32.partialorder %v345, 0.0
        %v367 = vsub.f32 0.0, %v365
        %v368 = vsel %vm366, %v365, %v367
        %v369 = vadd.f32 %v368, 1.0
        %v370 = vmul.f32 %v344, %v369
        %v371 = vld [vmem:[#allocation4] sm:$0xff]
        %v372 = vld [vmem:[#allocation4 + $0x8] sm:$0xff]
        %v373 = vld [vmem:[#allocation4 + $0x10] sm:$0xff]
        %v374 = vld [vmem:[#allocation4 + $0x18] sm:$0xff]
        %v375 = vld [vmem:[#allocation4 + $0x20] sm:$0xff]
        %v376 = vld [vmem:[#allocation4 + $0x28] sm:$0xff]
        %v377 = vld [vmem:[#allocation4 + $0x30] sm:$0xff]
        %v378 = vld [vmem:[#allocation4 + $0x38] sm:$0xff]
        %v379 = vld [vmem:[#allocation4 + $0x40] sm:$0xff]
        %v380 = vld [vmem:[#allocation4 + $0x48] sm:$0xff]
        %v381 = vld [vmem:[#allocation4 + $0x50] sm:$0xff]
        %v382 = vld [vmem:[#allocation4 + $0x58] sm:$0xff]
        %v383 = vld [vmem:[#allocation4 + $0x60] sm:$0xff]
        %v384 = vld [vmem:[#allocation4 + $0x68] sm:$0xff]
        %v385 = vld [vmem:[#allocation4 + $0x70] sm:$0xff]
        %v386 = vld [vmem:[#allocation4 + $0x78] sm:$0xff]
        %v387 = vld [vmem:[%s4] sm:$0x1]
        %v389 = vlaneseq
        %v390 = vshrl.u32 %v389, 7
        %v391 = vsub.s32 0, %v390
        %v392 = vrot.slane %v387, %v391
        %394 = vmatprep.subr.mxu0 0.0
        %395 = vmatpush1.msra.mxu0 %v386
        %396 = vmatprep.subr.mxu0 0.0
        %397 = vmatpush1.msra.mxu0 %v385
        %398 = vmatprep.subr.mxu0 0.0
        %399 = vmatpush1.msra.mxu0 %v384
        %400 = vmatprep.subr.mxu0 0.0
        %401 = vmatpush1.msra.mxu0 %v383
        %402 = vmatprep.subr.mxu0 0.0
        %403 = vmatpush1.msra.mxu0 %v382
        %404 = vmatprep.subr.mxu0 0.0
        %405 = vmatpush1.msra.mxu0 %v381
        %406 = vmatprep.subr.mxu0 0.0
        %407 = vmatpush1.msra.mxu0 %v380
        %408 = vmatprep.subr.mxu0 0.0
        %409 = vmatpush1.msra.mxu0 %v379
        %410 = vmatprep.subr.mxu0 0.0
        %411 = vmatpush1.msra.mxu0 %v378
        %412 = vmatprep.subr.mxu0 0.0
        %413 = vmatpush1.msra.mxu0 %v377
        %414 = vmatprep.subr.mxu0 0.0
        %415 = vmatpush1.msra.mxu0 %v376
        %416 = vmatprep.subr.mxu0 0.0
        %417 = vmatpush1.msra.mxu0 %v375
        %418 = vmatprep.subr.mxu0 0.0
        %419 = vmatpush1.msra.mxu0 %v374
        %420 = vmatprep.subr.mxu0 0.0
        %421 = vmatpush1.msra.mxu0 %v373
        %422 = vmatprep.subr.mxu0 0.0
        %423 = vmatpush1.msra.mxu0 %v372
        %424 = vmatprep.subr.mxu0 0.0
        %425 = vmatpush1.msra.mxu0 %v371
        %426 = vmatprep.subr.mxu0 0.0
        %427 = vmatpush2.msra.mxu0 0.0
        %428 = vmatprep.subr.mxu0 0.0
        %429 = vmatpush2.msra.mxu0 0.0
        %430 = vmatprep.subr.mxu0 0.0
        %431 = vmatpush2.msra.mxu0 0.0
        %432 = vmatprep.subr.mxu0 0.0
        %433 = vmatpush2.msra.mxu0 0.0
        %434 = vmatprep.subr.mxu0 0.0
        %435 = vmatpush2.msra.mxu0 0.0
        %436 = vmatprep.subr.mxu0 0.0
        %437 = vmatpush2.msra.mxu0 0.0
        %438 = vmatprep.subr.mxu0 0.0
        %439 = vmatpush2.msra.mxu0 0.0
        %440 = vmatprep.subr.mxu0 0.0
        %441 = vmatpush2.msra.mxu0 0.0
        %442 = vmatprep.subr.mxu0 0.0
        %443 = vmatpush2.msra.mxu0 0.0
        %444 = vmatprep.subr.mxu0 0.0
        %445 = vmatpush2.msra.mxu0 0.0
        %446 = vmatprep.subr.mxu0 0.0
        %447 = vmatpush2.msra.mxu0 0.0
        %448 = vmatprep.subr.mxu0 0.0
        %449 = vmatpush2.msra.mxu0 0.0
        %450 = vmatprep.subr.mxu0 0.0
        %451 = vmatpush2.msra.mxu0 0.0
        %452 = vmatprep.subr.mxu0 0.0
        %453 = vmatpush2.msra.mxu0 0.0
        %454 = vmatprep.subr.mxu0 0.0
        %455 = vmatpush2.msra.mxu0 0.0
        %456 = vmatprep.subr.mxu0 0.0
        %457 = vmatpush2.msra.mxu0 0.0
        %458 = vmatprep.mubr.f32.mxu0 0.0
        %459 = vmatmul.mubr.f32.gmra.mxu0 %v370
        %v460 = vpop.f32.mrf.mxu0
        %v461 = vadd.f32 %v392, %v460
        %v462 = vpop.f32.mrf.mxu0
        %463 = vdwg.mxu0
        %464 = vst [vmem:[%s249] sm:$0xff] %v461
        %p465 = scmp.lt.s32.totalorder %s18, 1
        %s466 = scalar_select %p465, %s18, 1
        %s467 = smul.addr %s466, 8
        %s468 = scalar_lea.vmem %s5, %s467
        // Predicated region
        $region49: #{mlp_forward.1} parent=39 // pred_check
          %p469 = pneg %p146
        $region50: #{mlp_forward.1} parent=39 // pred_check_branch
          %471 = sbr.rel (%p469) target = $region52
        $region51: #{mlp_forward.1} parent=39 // pred_region
          _
        $region52: #{mlp_forward.1} parent=39 // pred_fallthru
          _
      $region40: #{mlp_forward.1} parent=5 // pred_fallthru
        _
      %p472 = scmp.le.s32.totalorder 2, %s13
      // Predicated region
      $region53: #{mlp_forward.1} parent=5 // pred_check
        %p473 = pneg %p472
      $region54: #{mlp_forward.1} parent=5 // pred_check_branch
        %475 = sbr.rel (%p473) target = $region56
      $region55: #{mlp_forward.1} parent=5 // pred_region
        %s476 = ssub.s32 %s13, 2
        // Predicated region
        $region57: #{mlp_forward.1} parent=55 // pred_check
          %p477 = pneg %p152
        $region58: #{mlp_forward.1} parent=55 // pred_check_branch
          %479 = sbr.rel (%p477) target = $region60
        $region59: #{mlp_forward.1} parent=55 // pred_region
          %p480 = scmp.lt.s32.totalorder %s19, 1
          %s481 = scalar_select %p480, %s19, 1
          %s482 = smul.addr %s481, 8
          %s483 = scalar_lea.vmem %s5, %s482
        $region60: #{mlp_forward.1} parent=55 // pred_fallthru
          _
      $region56: #{mlp_forward.1} parent=5 // pred_fallthru
        _
    $region6: #{mlp_forward.1} parent=1 // loop_footer
      %s17 = sadd.s32 1, %s13
    $region7: #{mlp_forward.1} parent=1 // loop_footer_branch
      %12 = sbr.rel target = $region3
    $region8: #{mlp_forward.1} parent=1 // loop_exit
      _
    %484 = vsyncpa [#allocation3], 1
    %s485 = scalar_lea.sflag [#allocation3], 1
    %486 = vsyncpa %s485, 1
    %487 = vsyncpa [#allocation5], 1

</llo_original>
